<compile_context>
chip_gen: v7x
topology: tpu7x:2x2x1
jax: 0.10.0
libtpu: 0.0.40
codegen_flags: <defaults>
</compile_context>

<pallas_src>
import jax
import jax.numpy as jnp
from jax.experimental import pallas as pl
from jax.experimental.pallas import tpu as pltpu

# "Environment" constants (synthetic, small)
MAX_SEQ_LEN = 8
NUM_HEADS = 4
NUM_FEATURES = 32          # must be divisible by NUM_HEADS
VOCAB_SIZE = 64            # size of the pre-trained `emb` table (synthetic)
DEP_PAD_IDX = 36           # nn.Embedding(36 + 1, F, padding_idx=36)
DEP_VOCAB = DEP_PAD_IDX + 1

# Fused-table layout (static):
#   rows [0, 37)         : dependency embeddings (row 36 = padding row)
#   rows [40, 104)       : token embeddings, at a sublane-aligned offset
#   rows 37-39, 104-127  : zero padding (unreachable for valid ids)
_D_PAD = ((DEP_VOCAB + 7) // 8) * 8                      # 40
_K_ROWS = ((_D_PAD + VOCAB_SIZE + 127) // 128) * 128     # 128
assert _K_ROWS == 128, "keep K at exactly one 128-wide MXU contraction"


def _dep_encoder_kernel(ids_ref, dep_ref, table_t_ref, x_ref, dvec_ref):
    """Per-batch fused embedding gathers as one-hot MXU matmuls.

    table_t_ref : (F, 128)  fused table, transposed (features on sublanes)
    ids_ref     : (1, S)    token ids for this batch element
    dep_ref     : (1, S*S)  dependency ids, -1 = "no dependency"
    x_ref       : (F, S)    token embeddings   (features on sublanes, tokens on lanes)
    dvec_ref    : (F, S*S)  dependency embeddings
    """
    tbl = table_t_ref[...]
    k = tbl.shape[1]

    # Token gather: shift ids into the vocab block of the fused table.  The one-hot
    # is exact 0/1 in f32, so the matmul is an exact gather (no bf16 rounding —
    # verified by the tight tolerance check in __main__).
    ids = ids_ref[...] + _D_PAD                                     # (1, S)
    row = jax.lax.broadcasted_iota(jnp.int32, (k, ids.shape[1]), 0)
    onehot_x = (row == ids).astype(tbl.dtype)                       # (K, S)
    x_ref[...] = jnp.dot(tbl, onehot_x,
                         preferred_element_type=jnp.float32).astype(x_ref.dtype)

    # Dependency gather: -1 ("no dependency") matches no row -> zero column for free;
    # a literal 36 is remapped to -1 so those rows are forced to zero exactly like
    # the reference (which zeroes them regardless of the padding row's contents).
    dep = dep_ref[...]                                              # (1, S*S)
    dep = jnp.where(dep == DEP_PAD_IDX, -1, dep)
    row = jax.lax.broadcasted_iota(jnp.int32, (k, dep.shape[1]), 0)
    onehot_d = (row == dep).astype(tbl.dtype)                       # (K, S*S)
    dvec_ref[...] = jnp.dot(tbl, onehot_d,
                            preferred_element_type=jnp.float32).astype(dvec_ref.dtype)


def build_fused_table(vocab_table, dep_table):
    """One-time parameter prep: pack dep + vocab tables into one (F, 128) slab."""
    V, F = vocab_table.shape
    D = dep_table.shape[0]
    assert D == DEP_VOCAB and V == VOCAB_SIZE
    table = jnp.zeros((_K_ROWS, F), jnp.float32)
    table = table.at[:D].set(dep_table.astype(jnp.float32))
    table = table.at[_D_PAD:_D_PAD + V].set(vocab_table.astype(jnp.float32))
    return table.T        # (F, 128): K lane-dense for the in-kernel iota compares


@jax.jit
def dependency_encoder(in_ids, mask, table_t):
    """Pallas version of DependencyEncoder.forward's computed quantities.

    Returns (x, mask_vec).
    # TODO(synk): reference forward ends with `pass` (returns None) and never applies
    # rotary_emb; we return the computed intermediates (x, mask_vec).
    """
    assert in_ids.shape[-1] == mask.shape[-2] == MAX_SEQ_LEN, (
        f"size mismatch \ninput_ids : {in_ids.shape} \nmask : {mask.shape}")
    B, S = in_ids.shape
    SS = S * S
    F, K = table_t.shape

    ids3 = in_ids.astype(jnp.int32).reshape(B, 1, S)
    dep3 = mask.astype(jnp.int32).reshape(B, 1, SS)

    cost = pl.CostEstimate(
        flops=2 * B * F * K * (S + SS),
        transcendentals=0,
        bytes_accessed=(table_t.size + ids3.size + dep3.size + B * F * (S + SS)) * 4,
    )

    x_out, dvec_out = pl.pallas_call(
        _dep_encoder_kernel,
        grid=(B,),
        in_specs=[
            pl.BlockSpec((None, 1, S), lambda b: (b, 0, 0)),
            pl.BlockSpec((None, 1, SS), lambda b: (b, 0, 0)),
            # constant index_map: the fused table is fetched once and stays
            # VMEM-resident across all grid steps.
            pl.BlockSpec((F, K), lambda b: (0, 0)),
        ],
        out_specs=[
            pl.BlockSpec((None, F, S), lambda b: (b, 0, 0)),
            pl.BlockSpec((None, F, SS), lambda b: (b, 0, 0)),
        ],
        out_shape=[
            jax.ShapeDtypeStruct((B, F, S), jnp.float32),
            jax.ShapeDtypeStruct((B, F, SS), jnp.float32),
        ],
        compiler_params=pltpu.CompilerParams(
            dimension_semantics=("parallel",),      # batch axis across TCs (v7x)
            vmem_limit_bytes=32 * 1024 * 1024,      # explicit; fits v7x's 64 MiB/TC
        ),
        cost_estimate=cost,
    )(ids3, dep3, table_t)

    # TODO(synk): at real sizes have the consumer accept the feature-major (F, n)
    # layout instead of round-tripping the full dep slab through HBM for a transpose;
    # here these fuse under jit and are negligible.
    x = jnp.transpose(x_out, (0, 2, 1))                             # (B, S, F)
    mask_vec = jnp.transpose(dvec_out, (0, 2, 1)).reshape(B, S, S, F)
    return x, mask_vec


def _reference(in_ids, mask, vocab_table, dep_table):
    x = vocab_table[in_ids]
    dep = jnp.where(mask == -1, DEP_PAD_IDX, mask)
    mvec = dep_table[dep]
    mvec = jnp.where((dep == DEP_PAD_IDX)[..., None], 0.0, mvec)
    return x, mvec


if __name__ == "__main__":
    key = jax.random.PRNGKey(0)
    k_emb, k_dep, k_ids, k_mask = jax.random.split(key, 4)

    B, S, F = 2, MAX_SEQ_LEN, NUM_FEATURES

    # Deterministic synthetic parameters (no checkpoint loading).
    # TODO(synk): `load_embeds` reads utils/embed.pt; synthesized here instead.
    vocab_table = jax.random.normal(k_emb, (VOCAB_SIZE, F), dtype=jnp.float32)
    dep_table = jax.random.normal(k_dep, (DEP_VOCAB, F), dtype=jnp.float32)
    dep_table = dep_table.at[DEP_PAD_IDX].set(0.0)   # nn.Embedding padding_idx row

    in_ids = jax.random.randint(k_ids, (B, S), 0, VOCAB_SIZE, dtype=jnp.int32)
    # dependency mask: values in [-1, 35], -1 meaning "no dependency"
    mask = jax.random.randint(k_mask, (B, S, S), -1, 36, dtype=jnp.int32)

    # One-time parameter prep, hoisted out of the per-call path.
    table_t = jax.block_until_ready(build_fused_table(vocab_table, dep_table))

    x, mask_vec = dependency_encoder(in_ids, mask, table_t)
    jax.block_until_ready((x, mask_vec))

    x_ref, mvec_ref = _reference(in_ids, mask, vocab_table, dep_table)
    assert x.shape == (B, S, F) and mask_vec.shape == (B, S, S, F)
    # Tight tolerance doubles as a check that the f32 one-hot matmul lowers to an
    # exact gather (a single bf16 MXU pass would show ~1e-3 errors and fail here).
    assert jnp.allclose(x, x_ref, atol=1e-6), "token embedding mismatch"
    assert jnp.allclose(mask_vec, mvec_ref, atol=1e-6), "dep embedding mismatch"

    print("KERNEL_OK")
</pallas_src>

<mosaic_0001>
module attributes {stable_mosaic.version = 11 : i64} {
  func.func @_dep_encoder_kernel(%arg0: i32, %arg1: memref<1x1x8xi32, #tpu.memory_space<vmem>>, %arg2: memref<1x1x64xi32, #tpu.memory_space<vmem>>, %arg3: memref<32x128xf32, #tpu.memory_space<vmem>>, %arg4: memref<1x32x8xf32, #tpu.memory_space<vmem>>, %arg5: memref<1x32x64xf32, #tpu.memory_space<vmem>>) attributes {dimension_semantics = [#tpu.dimension_semantics<parallel>], iteration_bounds = array<i64: 2>, scalar_prefetch = 0 : i64, scratch_operands = 0 : i64, tpu.core_type = #tpu.core_type<tc>, window_params = [{transform_indices = @transform_0, window_bounds = array<i64: 1, 1, 8>}, {transform_indices = @transform_1, window_bounds = array<i64: 1, 1, 64>}, {pipeline_mode = #tpu.pipeline_mode<synchronous>, transform_indices = @transform_2, window_bounds = array<i64: 32, 128>}, {transform_indices = @transform_3, window_bounds = array<i64: 1, 32, 8>}, {transform_indices = @transform_4, window_bounds = array<i64: 1, 32, 64>}]} {
    %c0 = arith.constant 0 : index
    %c0_0 = arith.constant 0 : index
    %0 = vector.load %arg3[%c0, %c0_0] : memref<32x128xf32, #tpu.memory_space<vmem>>, vector<32x128xf32>
    %c0_1 = arith.constant 0 : index
    %c0_2 = arith.constant 0 : index
    %c0_3 = arith.constant 0 : index
    %1 = vector.load %arg1[%c0_1, %c0_2, %c0_3] : memref<1x1x8xi32, #tpu.memory_space<vmem>>, vector<1x1x8xi32>
    %2 = vector.shape_cast %1 : vector<1x1x8xi32> to vector<1x8xi32>
    %c40_i32 = arith.constant 40 : i32
    %3 = vector.broadcast %c40_i32 : i32 to vector<1x8xi32>
    %4 = arith.addi %2, %3 : vector<1x8xi32>
    %5 = tpu.iota {dimensions = array<i32: 0>} : vector<128x8xi32>
    %6 = vector.broadcast %4 : vector<1x8xi32> to vector<128x8xi32>
    %7 = arith.cmpi eq, %5, %6 : vector<128x8xi32>
    %8 = arith.extui %7 : vector<128x8xi1> to vector<128x8xi32>
    %9 = arith.sitofp %8 : vector<128x8xi32> to vector<128x8xf32>
    %cst = arith.constant dense<0.000000e+00> : vector<32x8xf32>
    %10 = tpu.matmul %0, %9, %cst {dimension_numbers = #tpu.dot_dimension_numbers<[1], [0], [0], [1], [0, 0, 1, 1], [], []>} : vector<32x128xf32>, vector<128x8xf32>, vector<32x8xf32> -> vector<32x8xf32>
    %c0_4 = arith.constant 0 : index
    %c0_5 = arith.constant 0 : index
    %c0_6 = arith.constant 0 : index
    %11 = vector.load %arg4[%c0_4, %c0_5, %c0_6] : memref<1x32x8xf32, #tpu.memory_space<vmem>>, vector<1x32x8xf32>
    %12 = vector.shape_cast %11 : vector<1x32x8xf32> to vector<32x8xf32>
    %13 = vector.shape_cast %10 : vector<32x8xf32> to vector<1x32x8xf32>
    tpu.vector_store %arg4[%c0_4, %c0_5, %c0_6], %13 {strides = array<i32>} : memref<1x32x8xf32, #tpu.memory_space<vmem>>, vector<1x32x8xf32>,
    %c0_7 = arith.constant 0 : index
    %c0_8 = arith.constant 0 : index
    %c0_9 = arith.constant 0 : index
    %14 = vector.load %arg2[%c0_7, %c0_8, %c0_9] : memref<1x1x64xi32, #tpu.memory_space<vmem>>, vector<1x1x64xi32>
    %15 = vector.shape_cast %14 : vector<1x1x64xi32> to vector<1x64xi32>
    %c36_i32 = arith.constant 36 : i32
    %16 = vector.broadcast %c36_i32 : i32 to vector<1x64xi32>
    %17 = arith.cmpi eq, %15, %16 : vector<1x64xi32>
    %c-1_i32 = arith.constant -1 : i32
    %18 = vector.broadcast %c-1_i32 : i32 to vector<1x64xi32>
    %19 = arith.select %17, %18, %15 : vector<1x64xi1>, vector<1x64xi32>
    %20 = tpu.iota {dimensions = array<i32: 0>} : vector<128x64xi32>
    %21 = vector.broadcast %19 : vector<1x64xi32> to vector<128x64xi32>
    %22 = arith.cmpi eq, %20, %21 : vector<128x64xi32>
    %23 = arith.extui %22 : vector<128x64xi1> to vector<128x64xi32>
    %24 = arith.sitofp %23 : vector<128x64xi32> to vector<128x64xf32>
    %cst_10 = arith.constant dense<0.000000e+00> : vector<32x64xf32>
    %25 = tpu.matmul %0, %24, %cst_10 {dimension_numbers = #tpu.dot_dimension_numbers<[1], [0], [0], [1], [0, 0, 1, 1], [], []>} : vector<32x128xf32>, vector<128x64xf32>, vector<32x64xf32> -> vector<32x64xf32>
    %c0_11 = arith.constant 0 : index
    %c0_12 = arith.constant 0 : index
    %c0_13 = arith.constant 0 : index
    %26 = vector.load %arg5[%c0_11, %c0_12, %c0_13] : memref<1x32x64xf32, #tpu.memory_space<vmem>>, vector<1x32x64xf32>
    %27 = vector.shape_cast %26 : vector<1x32x64xf32> to vector<32x64xf32>
    %28 = vector.shape_cast %25 : vector<32x64xf32> to vector<1x32x64xf32>
    tpu.vector_store %arg5[%c0_11, %c0_12, %c0_13], %28 {strides = array<i32>} : memref<1x32x64xf32, #tpu.memory_space<vmem>>, vector<1x32x64xf32>,
    return
  }
  func.func @transform_0(%arg0: i32) -> (i32, i32, i32) {
    %c0_i32 = arith.constant 0 : i32
    %c0_i32_0 = arith.constant 0 : i32
    %c0_i32_1 = arith.constant 0 : i32
    return %arg0, %c0_i32, %c0_i32_0 : i32, i32, i32
  }
  func.func @transform_1(%arg0: i32) -> (i32, i32, i32) {
    %c0_i32 = arith.constant 0 : i32
    %c0_i32_0 = arith.constant 0 : i32
    %c0_i32_1 = arith.constant 0 : i32
    return %arg0, %c0_i32, %c0_i32_0 : i32, i32, i32
  }
  func.func @transform_2(%arg0: i32) -> (i32, i32) {
    %c0_i32 = arith.constant 0 : i32
    %c0_i32_0 = arith.constant 0 : i32
    %c0_i32_1 = arith.constant 0 : i32
    return %c0_i32, %c0_i32_0 : i32, i32
  }
  func.func @transform_3(%arg0: i32) -> (i32, i32, i32) {
    %c0_i32 = arith.constant 0 : i32
    %c0_i32_0 = arith.constant 0 : i32
    %c0_i32_1 = arith.constant 0 : i32
    return %arg0, %c0_i32, %c0_i32_0 : i32, i32, i32
  }
  func.func @transform_4(%arg0: i32) -> (i32, i32, i32) {
    %c0_i32 = arith.constant 0 : i32
    %c0_i32_0 = arith.constant 0 : i32
    %c0_i32_1 = arith.constant 0 : i32
    return %arg0, %c0_i32, %c0_i32_0 : i32, i32, i32
  }
}

</mosaic_0001>

<llo_original>
// kernel: dependency_encoder.1
$region0: #{dependency_encoder.1}
  #allocation0 [shape = 'u32[]', space=smem, size = 0x4, offset = 0x4, fixed_abs, tag = 'smem constant byte address 0x4 - core index']
  #allocation1 [shape = 'u32[144,128]{1,0:T(1,128)}', space=vmem, size = 0x12000, scoped, tag = 'internal scratch']
  %s0 = inlined_call_operand.hbm [shape: s32[2,1,8], index: 0, kind: input, shape index: {}]
  %s1 = inlined_call_operand.vmem [shape: s32[2,1,64], index: 1, kind: input, shape index: {}]
  %s2 = inlined_call_operand.vmem [shape: f32[32,128], index: 2, kind: input, shape index: {}]
  %s3 = inlined_call_operand.vmem [shape: f32[2,32,8], index: 3, kind: output, shape index: {0}]
  %s4 = inlined_call_operand.vmem [shape: f32[2,32,64], index: 4, kind: output, shape index: {1}]
  %5 = xla_tuple %s3, %s4
  %s6 = sld [smem:[#allocation0]]
  $region57: #{dependency_encoder.1} parent=0
    _
  %s8 = ssub.s32 1, %s6
  %s9 = scalar_select 0, %s8, %s6
  $region1: #{dependency_encoder.1} parent=0
    #allocation2 [shape = 'u8[1024]{0}', space=vmem, size = 0x400, scoped, tag = 'input window, operand 0']
    #allocation3 [shape = 's32[2]{0}', space=sflag, size = 0x8, scoped, tag = 'scoped memory for dependency_encoder.1']
    %10 = vsyncpa [#allocation3], 0
    %s11 = scalar_lea.sflag [#allocation3], 1
    %12 = vsyncpa %s11, 0
    loop: start=0, step=1, limit=4
    $region2: #{dependency_encoder.1} parent=1 // loop_pre_header
      _
    $region3: #{dependency_encoder.1} parent=1 // loop_header
      %s14 = sphi 0, %s18
      %p15 = scmp.ge.s32.totalorder %s14, 4
      %s24 = sphi 0, %s26
      %s27 = sphi 0, %s24
      %s28 = sphi 0, %s27
      %s44 = sphi 0, %s28
      %s50 = sphi 0, %s52
      %s53 = sphi 0, %s50
      %s54 = sphi 0, %s53
      %s70 = sphi 0, %s54
      %s74 = sphi 0, %s74
      %s76 = sphi 0, %s74
      %s77 = sphi 0, %s76
      %s91 = sphi 0, %s77
      %s97 = sphi 0, %s99
      %s100 = sphi 0, %s97
      %s101 = sphi 0, %s100
      %s117 = sphi 0, %s101
      %s123 = sphi 0, %s125
      %s126 = sphi 0, %s123
      %s127 = sphi 0, %s126
      %s143 = sphi 0, %s127
    $region4: #{dependency_encoder.1} parent=1 // loop_header_branch
      %17 = sbr.rel (%p15) target = $region8
    $region5: #{dependency_encoder.1} parent=1 // loop_body
      %s19 = ssub.s32 %s14, 1
      %s20 = ssub.s32 %s14, 2
      %s21 = sadd.s32 %s14, 1
      %s22 = ssub.s32 %s14, %s21
      %p23 = scmp.eq.s32.totalorder %s22, 0
      %s25 = sadd.s32 %s24, 1
      %s26 = scalar_select %p23, %s24, %s25
      %p29 = pneg %p23
      %p30 = scmp.eq.s32.totalorder %s14, 1
      %p31 = por %p29, %p30
      %p32 = scmp.ne.s32.totalorder %s24, %s27
      %p33 = scmp.eq.s32.totalorder %s14, 0
      %p34 = por %p32, %p33
      %p35 = scmp.ne.s32.totalorder %s24, %s27
      %p36 = scmp.eq.s32.totalorder %s19, 1
      %p37 = por %p35, %p36
      %p38 = scmp.ne.s32.totalorder %s27, %s28
      %p39 = scmp.eq.s32.totalorder %s19, 0
      %p40 = por %p38, %p39
      %p41 = scmp.ne.s32.totalorder %s27, %s28
      %p42 = scmp.eq.s32.totalorder %s20, 1
      %p43 = por %p41, %p42
      %p45 = scmp.ne.s32.totalorder %s28, %s44
      %p46 = scmp.eq.s32.totalorder %s20, 0
      %p47 = por %p45, %p46
      %s48 = ssub.s32 %s14, %s21
      %p49 = scmp.eq.s32.totalorder %s48, 0
      %s51 = sadd.s32 %s50, 1
      %s52 = scalar_select %p49, %s50, %s51
      %p55 = pneg %p49
      %p56 = scmp.eq.s32.totalorder %s14, 1
      %p57 = por %p55, %p56
      %p58 = scmp.ne.s32.totalorder %s50, %s53
      %p59 = scmp.eq.s32.totalorder %s14, 0
      %p60 = por %p58, %p59
      %p61 = scmp.ne.s32.totalorder %s50, %s53
      %p62 = scmp.eq.s32.totalorder %s19, 1
      %p63 = por %p61, %p62
      %p64 = scmp.ne.s32.totalorder %s53, %s54
      %p65 = scmp.eq.s32.totalorder %s19, 0
      %p66 = por %p64, %p65
      %p67 = scmp.ne.s32.totalorder %s53, %s54
      %p68 = scmp.eq.s32.totalorder %s20, 1
      %p69 = por %p67, %p68
      %p71 = scmp.ne.s32.totalorder %s54, %s70
      %p72 = scmp.eq.s32.totalorder %s20, 0
      %p73 = por %p71, %p72
      %s75 = sadd.s32 %s74, 1
      %p78 = scmp.eq.s32.totalorder %s14, 1
      %p79 = scmp.ne.s32.totalorder %s74, %s76
      %p80 = scmp.eq.s32.totalorder %s14, 0
      %p81 = por %p79, %p80
      %p82 = scmp.ne.s32.totalorder %s74, %s76
      %p83 = scmp.eq.s32.totalorder %s19, 1
      %p84 = por %p82, %p83
      %p85 = scmp.ne.s32.totalorder %s76, %s77
      %p86 = scmp.eq.s32.totalorder %s19, 0
      %p87 = por %p85, %p86
      %p88 = scmp.ne.s32.totalorder %s76, %s77
      %p89 = scmp.eq.s32.totalorder %s20, 1
      %p90 = por %p88, %p89
      %p92 = scmp.ne.s32.totalorder %s77, %s91
      %p93 = scmp.eq.s32.totalorder %s20, 0
      %p94 = por %p92, %p93
      %s95 = ssub.s32 %s14, %s21
      %p96 = scmp.eq.s32.totalorder %s95, 0
      %s98 = sadd.s32 %s97, 1
      %s99 = scalar_select %p96, %s97, %s98
      %p102 = pneg %p96
      %p103 = scmp.eq.s32.totalorder %s14, 1
      %p104 = por %p102, %p103
      %p105 = scmp.ne.s32.totalorder %s97, %s100
      %p106 = scmp.eq.s32.totalorder %s14, 0
      %p107 = por %p105, %p106
      %p108 = scmp.ne.s32.totalorder %s97, %s100
      %p109 = scmp.eq.s32.totalorder %s19, 1
      %p110 = por %p108, %p109
      %p111 = scmp.ne.s32.totalorder %s100, %s101
      %p112 = scmp.eq.s32.totalorder %s19, 0
      %p113 = por %p111, %p112
      %p114 = scmp.ne.s32.totalorder %s100, %s101
      %p115 = scmp.eq.s32.totalorder %s20, 1
      %p116 = por %p114, %p115
      %p118 = scmp.ne.s32.totalorder %s101, %s117
      %p119 = scmp.eq.s32.totalorder %s20, 0
      %p120 = por %p118, %p119
      %s121 = ssub.s32 %s14, %s21
      %p122 = scmp.eq.s32.totalorder %s121, 0
      %s124 = sadd.s32 %s123, 1
      %s125 = scalar_select %p122, %s123, %s124
      %p128 = pneg %p122
      %p129 = scmp.eq.s32.totalorder %s14, 1
      %p130 = por %p128, %p129
      %p131 = scmp.ne.s32.totalorder %s123, %s126
      %p132 = scmp.eq.s32.totalorder %s14, 0
      %p133 = por %p131, %p132
      %p134 = scmp.ne.s32.totalorder %s123, %s126
      %p135 = scmp.eq.s32.totalorder %s19, 1
      %p136 = por %p134, %p135
      %p137 = scmp.ne.s32.totalorder %s126, %s127
      %p138 = scmp.eq.s32.totalorder %s19, 0
      %p139 = por %p137, %p138
      %p140 = scmp.ne.s32.totalorder %s126, %s127
      %p141 = scmp.eq.s32.totalorder %s20, 1
      %p142 = por %p140, %p141
      %p144 = scmp.ne.s32.totalorder %s127, %s143
      %p145 = scmp.eq.s32.totalorder %s20, 0
      %p146 = por %p144, %p145
      %p147 = scmp.le.s32.totalorder 1, %s14
      %p148 = scmp.lt.s32.totalorder %s14, 3
      %p149 = pnand %p147, %p148
      %p150 = pneg %p149
      // Predicated region
      $region9: #{dependency_encoder.1} parent=5 // pred_check
        _
      $region10: #{dependency_encoder.1} parent=5 // pred_check_branch
        %152 = sbr.rel (%p149) target = $region12
      $region11: #{dependency_encoder.1} parent=5 // pred_region
        %s153 = ssub.s32 %s14, 1
        // Predicated region
        $region13: #{dependency_encoder.1} parent=11 // pred_check
          %p154 = pneg %p87
        $region14: #{dependency_encoder.1} parent=11 // pred_check_branch
          %156 = sbr.rel (%p154) target = $region16
        $region15: #{dependency_encoder.1} parent=11 // pred_region
          _
        $region16: #{dependency_encoder.1} parent=11 // pred_fallthru
          _
      $region12: #{dependency_encoder.1} parent=5 // pred_fallthru
        _
      %p157 = scmp.lt.s32.totalorder %s14, 2
      // Predicated region
      $region17: #{dependency_encoder.1} parent=5 // pred_check
        %p158 = pneg %p157
      $region18: #{dependency_encoder.1} parent=5 // pred_check_branch
        %160 = sbr.rel (%p158) target = $region20
      $region19: #{dependency_encoder.1} parent=5 // pred_region
        // Predicated region
        $region21: #{dependency_encoder.1} parent=19 // pred_check
          %p161 = pneg %p34
        $region22: #{dependency_encoder.1} parent=19 // pred_check_branch
          %163 = sbr.rel (%p161) target = $region24
        $region23: #{dependency_encoder.1} parent=19 // pred_region
          %s164 = sand.u32 %s24, 1
          %s165 = scalar_lea.sflag [#allocation3], %s164
          %s166 = sand.u32 %s24, 1
          %s167 = scalar_lea.vmem [#allocation2], %s166
          %s169 = ssub.s32 16, 16
          %170 = vsyncadd %s165, %s169
          %s171 = smul.addr %s14, 16
          %s172 = scalar_lea.hbm %s0, %s171
          %s174 = sshll.u32 %s167, 4
          %s175 = int_to_ptr.vmem [resolvable:$true] %s174
          %177 = dma.hbm_to_vmem [thread:$0]  %s172, 16, %s175, %s165
        $region24: #{dependency_encoder.1} parent=19 // pred_fallthru
          _
        // Predicated region
        $region25: #{dependency_encoder.1} parent=19 // pred_check
          %p178 = pneg %p60
        $region26: #{dependency_encoder.1} parent=19 // pred_check_branch
          %180 = sbr.rel (%p178) target = $region28
        $region27: #{dependency_encoder.1} parent=19 // pred_region
          %p181 = scmp.lt.s32.totalorder %s14, 1
          %s182 = scalar_select %p181, %s14, 1
          %s183 = scalar_lea.vmem %s1, %s182
        $region28: #{dependency_encoder.1} parent=19 // pred_fallthru
          _
      $region20: #{dependency_encoder.1} parent=5 // pred_fallthru
        _
      %p184 = scmp.le.s32.totalorder 1, %s14
      %p185 = scmp.lt.s32.totalorder %s14, 3
      %p186 = pnand %p184, %p185
      %p187 = pneg %p186
      // Predicated region
      $region29: #{dependency_encoder.1} parent=5 // pred_check
        _
      $region30: #{dependency_encoder.1} parent=5 // pred_check_branch
        %189 = sbr.rel (%p186) target = $region32
      $region31: #{dependency_encoder.1} parent=5 // pred_region
        %s190 = ssub.s32 %s14, 1
        %s191 = sand.u32 %s27, 1
        %s192 = scalar_lea.sflag [#allocation3], %s191
        %s193 = sand.u32 %s27, 1
        %s194 = scalar_lea.vmem [#allocation2], %s193
        // Predicated region
        $region33: #{dependency_encoder.1} parent=31 // pred_check
          %p195 = pneg %p40
        $region34: #{dependency_encoder.1} parent=31 // pred_check_branch
          %197 = sbr.rel (%p195) target = $region36
        $region35: #{dependency_encoder.1} parent=31 // pred_region
          %198 = dma.done %s192, 16
        $region36: #{dependency_encoder.1} parent=31 // pred_fallthru
          _
        %s199 = sand.u32 %s27, 1
        %s200 = scalar_lea.sflag [#allocation3], %s199
        %s201 = sand.u32 %s27, 1
        %s202 = scalar_lea.vmem [#allocation2], %s201
        %p203 = pneg %p40
        %p204 = pneg %p37
        %p205 = scmp.lt.s32.totalorder %s19, 1
        %s206 = scalar_select %p205, %s19, 1
        %s207 = scalar_lea.vmem %s1, %s206
        %p208 = pneg %p66
        %p209 = pneg %p63
        %p210 = pneg %p87
        %p211 = pneg %p84
        %p212 = pneg %p113
        %p213 = pneg %p110
        %p214 = scmp.lt.s32.totalorder %s19, 1
        %s215 = scalar_select %p214, %s19, 1
        %s216 = smul.addr %s215, 4
        %s217 = smul.addr %s216, 8
        %s218 = scalar_lea.vmem %s3, %s217
        %p219 = pneg %p139
        %p220 = pneg %p136
        %p221 = scmp.lt.s32.totalorder %s19, 1
        %s222 = scalar_select %p221, %s19, 1
        %s223 = smul.addr %s222, 4
        %s224 = smul.addr %s223, 8
        %s225 = scalar_lea.vmem %s4, %s224
        %p226 = scmp.lt.s32.totalorder %s19, 1
        %s227 = scalar_select %p226, %s19, 1
        %s228 = scalar_lea.vmem %s1, %s227
        %p229 = scmp.lt.s32.totalorder %s19, 1
        %s230 = scalar_select %p229, %s19, 1
        %s231 = smul.addr %s230, 4
        %s232 = smul.addr %s231, 8
        %s233 = scalar_lea.vmem %s3, %s232
        %p234 = scmp.lt.s32.totalorder %s19, 1
        %s235 = scalar_select %p234, %s19, 1
        %s236 = smul.addr %s235, 4
        %s237 = smul.addr %s236, 8
        %s238 = scalar_lea.vmem %s4, %s237
        %v239 = vld [vmem:[%s2] sm:$0xff]
        %v240 = vld [vmem:[%s2 + $0x8] sm:$0xff]
        %v241 = vld [vmem:[%s2 + $0x10] sm:$0xff]
        %v242 = vld [vmem:[%s2 + $0x18] sm:$0xff]
        %v243 = vld [vmem:[%s194] sm:$0x1]
        %v244 = vadd.s32 %v243, 40
        %v245 = vlaneseq
        %v246 = vshrl.u32 %v245, 7
        %v247 = vadd.s32 %v246, 8
        %v248 = vadd.s32 %v246, 16
        %v249 = vadd.s32 %v246, 24
        %v250 = vadd.s32 %v246, 32
        %v251 = vadd.s32 %v246, 40
        %v252 = vadd.s32 %v246, 48
        %v253 = vadd.s32 %v246, 56
        %v254 = vadd.s32 %v246, 64
        %v255 = vadd.s32 %v246, 72
        %v256 = vadd.s32 %v246, 80
        %v257 = vadd.s32 %v246, 88
        %v258 = vadd.s32 %v246, 96
        %v259 = vadd.s32 %v246, 104
        %v260 = vadd.s32 %v246, 112
        %v261 = vadd.s32 %v246, 120
        %v262 = vlaneseq
        %v263 = vshrl.u32 %v262, 7
        %v264 = vsub.s32 0, %v263
        %v265 = vrot.slane %v244, %v264
        %vm266 = vcmp.eq.s32.totalorder %v246, %v265
        %vm267 = vcmp.eq.s32.totalorder %v247, %v265
        %vm268 = vcmp.eq.s32.totalorder %v248, %v265
        %vm269 = vcmp.eq.s32.totalorder %v249, %v265
        %vm270 = vcmp.eq.s32.totalorder %v250, %v265
        %vm271 = vcmp.eq.s32.totalorder %v251, %v265
        %vm272 = vcmp.eq.s32.totalorder %v252, %v265
        %vm273 = vcmp.eq.s32.totalorder %v253, %v265
        %vm274 = vcmp.eq.s32.totalorder %v254, %v265
        %vm275 = vcmp.eq.s32.totalorder %v255, %v265
        %vm276 = vcmp.eq.s32.totalorder %v256, %v265
        %vm277 = vcmp.eq.s32.totalorder %v257, %v265
        %vm278 = vcmp.eq.s32.totalorder %v258, %v265
        %vm279 = vcmp.eq.s32.totalorder %v259, %v265
        %vm280 = vcmp.eq.s32.totalorder %v260, %v265
        %vm281 = vcmp.eq.s32.totalorder %v261, %v265
        %v282 = vsel %vm266, 1, 0
        %v283 = vsel %vm267, 1, 0
        %v284 = vsel %vm268, 1, 0
        %v285 = vsel %vm269, 1, 0
        %v286 = vsel %vm270, 1, 0
        %v287 = vsel %vm271, 1, 0
        %v288 = vsel %vm272, 1, 0
        %v289 = vsel %vm273, 1, 0
        %v290 = vsel %vm274, 1, 0
        %v291 = vsel %vm275, 1, 0
        %v292 = vsel %vm276, 1, 0
        %v293 = vsel %vm277, 1, 0
        %v294 = vsel %vm278, 1, 0
        %v295 = vsel %vm279, 1, 0
        %v296 = vsel %vm280, 1, 0
        %v297 = vsel %vm281, 1, 0
        %v298 = vcvt.s32.f32 %v282
        %v299 = vcvt.s32.f32 %v283
        %v300 = vcvt.s32.f32 %v284
        %v301 = vcvt.s32.f32 %v285
        %v302 = vcvt.s32.f32 %v286
        %v303 = vcvt.s32.f32 %v287
        %v304 = vcvt.s32.f32 %v288
        %v305 = vcvt.s32.f32 %v289
        %v306 = vcvt.s32.f32 %v290
        %v307 = vcvt.s32.f32 %v291
        %v308 = vcvt.s32.f32 %v292
        %v309 = vcvt.s32.f32 %v293
        %v310 = vcvt.s32.f32 %v294
        %v311 = vcvt.s32.f32 %v295
        %v312 = vcvt.s32.f32 %v296
        %v313 = vcvt.s32.f32 %v297
        %314 = vmatprep.subr.mxu0 0.0
        %315 = vmatpush1.msra.mxu0 %v298
        %316 = vmatprep.subr.mxu0 0.0
        %317 = vmatpush1.msra.mxu0 %v299
        %318 = vmatprep.subr.mxu0 0.0
        %319 = vmatpush1.msra.mxu0 %v300
        %320 = vmatprep.subr.mxu0 0.0
        %321 = vmatpush1.msra.mxu0 %v301
        %322 = vmatprep.subr.mxu0 0.0
        %323 = vmatpush1.msra.mxu0 %v302
        %324 = vmatprep.subr.mxu0 0.0
        %325 = vmatpush1.msra.mxu0 %v303
        %326 = vmatprep.subr.mxu0 0.0
        %327 = vmatpush1.msra.mxu0 %v304
        %328 = vmatprep.subr.mxu0 0.0
        %329 = vmatpush1.msra.mxu0 %v305
        %330 = vmatprep.subr.mxu0 0.0
        %331 = vmatpush1.msra.mxu0 %v306
        %332 = vmatprep.subr.mxu0 0.0
        %333 = vmatpush1.msra.mxu0 %v307
        %334 = vmatprep.subr.mxu0 0.0
        %335 = vmatpush1.msra.mxu0 %v308
        %336 = vmatprep.subr.mxu0 0.0
        %337 = vmatpush1.msra.mxu0 %v309
        %338 = vmatprep.subr.mxu0 0.0
        %339 = vmatpush1.msra.mxu0 %v310
        %340 = vmatprep.subr.mxu0 0.0
        %341 = vmatpush1.msra.mxu0 %v311
        %342 = vmatprep.subr.mxu0 0.0
        %343 = vmatpush1.msra.mxu0 %v312
        %344 = vmatprep.subr.mxu0 0.0
        %345 = vmatpush1.msra.mxu0 %v313
        %346 = vmatprep.subr.mxu0 0.0
        %347 = vmatpush1.msra.mxu0 0.0
        %348 = vmatprep.subr.mxu0 0.0
        %349 = vmatpush1.msra.mxu0 0.0
        %350 = vmatprep.subr.mxu0 0.0
        %351 = vmatpush1.msra.mxu0 0.0
        %352 = vmatprep.subr.mxu0 0.0
        %353 = vmatpush1.msra.mxu0 0.0
        %354 = vmatprep.subr.mxu0 0.0
        %355 = vmatpush1.msra.mxu0 0.0
        %356 = vmatprep.subr.mxu0 0.0
        %357 = vmatpush1.msra.mxu0 0.0
        %358 = vmatprep.subr.mxu0 0.0
        %359 = vmatpush1.msra.mxu0 0.0
        %360 = vmatprep.subr.mxu0 0.0
        %361 = vmatpush1.msra.mxu0 0.0
        %362 = vmatprep.subr.mxu0 0.0
        %363 = vmatpush1.msra.mxu0 0.0
        %364 = vmatprep.subr.mxu0 0.0
        %365 = vmatpush1.msra.mxu0 0.0
        %366 = vmatprep.subr.mxu0 0.0
        %367 = vmatpush1.msra.mxu0 0.0
        %368 = vmatprep.subr.mxu0 0.0
        %369 = vmatpush1.msra.mxu0 0.0
        %370 = vmatprep.subr.mxu0 0.0
        %371 = vmatpush1.msra.mxu0 0.0
        %372 = vmatprep.subr.mxu0 0.0
        %373 = vmatpush1.msra.mxu0 0.0
        %374 = vmatprep.subr.mxu0 0.0
        %375 = vmatpush1.msra.mxu0 0.0
        %376 = vmatprep.subr.mxu0 0.0
        %377 = vmatpush1.msra.mxu0 0.0
        %378 = vmatprep.mubr.f32.mxu0 0.0
        %379 = vmatmul.mubr.f32.gmra.mrb[0].mxu0 %v239
        %v380 = vpop.f32.mrb[0].mxu0
        %v381 = vadd.f32 0.0, %v380
        %v382 = vpop.f32.mrb[0].mxu0
        %383 = vmatprep.mubr.f32.mxu0 0.0
        %384 = vmatmul.mubr.f32.gmra.mrb[0].mxu0 %v240
        %v385 = vpop.f32.mrb[0].mxu0
        %v386 = vadd.f32 0.0, %v385
        %v387 = vpop.f32.mrb[0].mxu0
        %388 = vmatprep.mubr.f32.mxu0 0.0
        %389 = vmatmul.mubr.f32.gmra.mrb[0].mxu0 %v241
        %v390 = vpop.f32.mrb[0].mxu0
        %v391 = vadd.f32 0.0, %v390
        %v392 = vpop.f32.mrb[0].mxu0
        %393 = vmatprep.mubr.f32.mxu0 0.0
        %394 = vmatmul.mubr.f32.gmra.mrb[0].mxu0 %v242
        %v395 = vpop.f32.mrb[0].mxu0
        %v396 = vadd.f32 0.0, %v395
        %v397 = vpop.f32.mrb[0].mxu0
        %398 = vdwg.mxu0
        %vm399 = vcmask 64512
        %400 = vst.msk [vmem:[%s233] sm:$0xff] %vm399, %v381
        %401 = vst.msk [vmem:[%s233 + $0x8] sm:$0xff] %vm399, %v386
        %402 = vst.msk [vmem:[%s233 + $0x10] sm:$0xff] %vm399, %v391
        %403 = vst.msk [vmem:[%s233 + $0x18] sm:$0xff] %vm399, %v396
        %v404 = vld [vmem:[%s228] sm:$0x1]
        %vm405 = vcmp.eq.s32.totalorder %v404, 36
        %v406 = vsel %vm405, 4294967295, %v404
        %v407 = vlaneseq
        %v408 = vshrl.u32 %v407, 7
        %v409 = vsub.s32 0, %v408
        %v410 = vrot.slane %v406, %v409
        %vm411 = vcmp.eq.s32.totalorder %v246, %v410
        %vm412 = vcmp.eq.s32.totalorder %v247, %v410
        %vm413 = vcmp.eq.s32.totalorder %v248, %v410
        %vm414 = vcmp.eq.s32.totalorder %v249, %v410
        %vm415 = vcmp.eq.s32.totalorder %v250, %v410
        %vm416 = vcmp.eq.s32.totalorder %v251, %v410
        %vm417 = vcmp.eq.s32.totalorder %v252, %v410
        %vm418 = vcmp.eq.s32.totalorder %v253, %v410
        %vm419 = vcmp.eq.s32.totalorder %v254, %v410
        %vm420 = vcmp.eq.s32.totalorder %v255, %v410
        %vm421 = vcmp.eq.s32.totalorder %v256, %v410
        %vm422 = vcmp.eq.s32.totalorder %v257, %v410
        %vm423 = vcmp.eq.s32.totalorder %v258, %v410
        %vm424 = vcmp.eq.s32.totalorder %v259, %v410
        %vm425 = vcmp.eq.s32.totalorder %v260, %v410
        %vm426 = vcmp.eq.s32.totalorder %v261, %v410
        %v427 = vsel %vm411, 1, 0
        %v428 = vsel %vm412, 1, 0
        %v429 = vsel %vm413, 1, 0
        %v430 = vsel %vm414, 1, 0
        %v431 = vsel %vm415, 1, 0
        %v432 = vsel %vm416, 1, 0
        %v433 = vsel %vm417, 1, 0
        %v434 = vsel %vm418, 1, 0
        %v435 = vsel %vm419, 1, 0
        %v436 = vsel %vm420, 1, 0
        %v437 = vsel %vm421, 1, 0
        %v438 = vsel %vm422, 1, 0
        %v439 = vsel %vm423, 1, 0
        %v440 = vsel %vm424, 1, 0
        %v441 = vsel %vm425, 1, 0
        %v442 = vsel %vm426, 1, 0
        %v443 = vcvt.s32.f32 %v427
        %v444 = vcvt.s32.f32 %v428
        %v445 = vcvt.s32.f32 %v429
        %v446 = vcvt.s32.f32 %v430
        %v447 = vcvt.s32.f32 %v431
        %v448 = vcvt.s32.f32 %v432
        %v449 = vcvt.s32.f32 %v433
        %v450 = vcvt.s32.f32 %v434
        %v451 = vcvt.s32.f32 %v435
        %v452 = vcvt.s32.f32 %v436
        %v453 = vcvt.s32.f32 %v437
        %v454 = vcvt.s32.f32 %v438
        %v455 = vcvt.s32.f32 %v439
        %v456 = vcvt.s32.f32 %v440
        %v457 = vcvt.s32.f32 %v441
        %v458 = vcvt.s32.f32 %v442
        %459 = vmatprep.subr.mxu0 0.0
        %460 = vmatpush1.msra.mxu0 %v443
        %461 = vmatprep.subr.mxu0 0.0
        %462 = vmatpush1.msra.mxu0 %v444
        %463 = vmatprep.subr.mxu0 0.0
        %464 = vmatpush1.msra.mxu0 %v445
        %465 = vmatprep.subr.mxu0 0.0
        %466 = vmatpush1.msra.mxu0 %v446
        %467 = vmatprep.subr.mxu0 0.0
        %468 = vmatpush1.msra.mxu0 %v447
        %469 = vmatprep.subr.mxu0 0.0
        %470 = vmatpush1.msra.mxu0 %v448
        %471 = vmatprep.subr.mxu0 0.0
        %472 = vmatpush1.msra.mxu0 %v449
        %473 = vmatprep.subr.mxu0 0.0
        %474 = vmatpush1.msra.mxu0 %v450
        %475 = vmatprep.subr.mxu0 0.0
        %476 = vmatpush1.msra.mxu0 %v451
        %477 = vmatprep.subr.mxu0 0.0
        %478 = vmatpush1.msra.mxu0 %v452
        %479 = vmatprep.subr.mxu0 0.0
        %480 = vmatpush1.msra.mxu0 %v453
        %481 = vmatprep.subr.mxu0 0.0
        %482 = vmatpush1.msra.mxu0 %v454
        %483 = vmatprep.subr.mxu0 0.0
        %484 = vmatpush1.msra.mxu0 %v455
        %485 = vmatprep.subr.mxu0 0.0
        %486 = vmatpush1.msra.mxu0 %v456
        %487 = vmatprep.subr.mxu0 0.0
        %488 = vmatpush1.msra.mxu0 %v457
        %489 = vmatprep.subr.mxu0 0.0
        %490 = vmatpush1.msra.mxu0 %v458
        %491 = vmatprep.subr.mxu0 0.0
        %492 = vmatpush1.msra.mxu0 0.0
        %493 = vmatprep.subr.mxu0 0.0
        %494 = vmatpush1.msra.mxu0 0.0
        %495 = vmatprep.subr.mxu0 0.0
        %496 = vmatpush1.msra.mxu0 0.0
        %497 = vmatprep.subr.mxu0 0.0
        %498 = vmatpush1.msra.mxu0 0.0
        %499 = vmatprep.subr.mxu0 0.0
        %500 = vmatpush1.msra.mxu0 0.0
        %501 = vmatprep.subr.mxu0 0.0
        %502 = vmatpush1.msra.mxu0 0.0
        %503 = vmatprep.subr.mxu0 0.0
        %504 = vmatpush1.msra.mxu0 0.0
        %505 = vmatprep.subr.mxu0 0.0
        %506 = vmatpush1.msra.mxu0 0.0
        %507 = vmatprep.subr.mxu0 0.0
        %508 = vmatpush1.msra.mxu0 0.0
        %509 = vmatprep.subr.mxu0 0.0
        %510 = vmatpush1.msra.mxu0 0.0
        %511 = vmatprep.subr.mxu0 0.0
        %512 = vmatpush1.msra.mxu0 0.0
        %513 = vmatprep.subr.mxu0 0.0
        %514 = vmatpush1.msra.mxu0 0.0
        %515 = vmatprep.subr.mxu0 0.0
        %516 = vmatpush1.msra.mxu0 0.0
        %517 = vmatprep.subr.mxu0 0.0
        %518 = vmatpush1.msra.mxu0 0.0
        %519 = vmatprep.subr.mxu0 0.0
        %520 = vmatpush1.msra.mxu0 0.0
        %521 = vmatprep.subr.mxu0 0.0
        %522 = vmatpush1.msra.mxu0 0.0
        %523 = vmatprep.mubr.f32.mxu0 0.0
        %524 = vmatmul.mubr.f32.gmra.mrb[0].mxu0 %v239
        %v525 = vpop.f32.mrb[0].mxu0
        %v526 = vadd.f32 0.0, %v525
        %v527 = vpop.f32.mrb[0].mxu0
        %528 = vmatprep.mubr.f32.mxu0 0.0
        %529 = vmatmul.mubr.f32.gmra.mrb[0].mxu0 %v240
        %v530 = vpop.f32.mrb[0].mxu0
        %v531 = vadd.f32 0.0, %v530
        %v532 = vpop.f32.mrb[0].mxu0
        %533 = vmatprep.mubr.f32.mxu0 0.0
        %534 = vmatmul.mubr.f32.gmra.mrb[0].mxu0 %v241
        %v535 = vpop.f32.mrb[0].mxu0
        %v536 = vadd.f32 0.0, %v535
        %v537 = vpop.f32.mrb[0].mxu0
        %538 = vmatprep.mubr.f32.mxu0 0.0
        %539 = vmatmul.mubr.f32.gmra.mrb[0].mxu0 %v242
        %v540 = vpop.f32.mrb[0].mxu0
        %v541 = vadd.f32 0.0, %v540
        %v542 = vpop.f32.mrb[0].mxu0
        %543 = vdwg.mxu0
        %vm544 = vcmask 523264
        %545 = vst.msk [vmem:[%s238] sm:$0xff] %vm544, %v526
        %546 = vst.msk [vmem:[%s238 + $0x8] sm:$0xff] %vm544, %v531
        %547 = vst.msk [vmem:[%s238 + $0x10] sm:$0xff] %vm544, %v536
        %548 = vst.msk [vmem:[%s238 + $0x18] sm:$0xff] %vm544, %v541
        %p549 = scmp.lt.s32.totalorder %s19, 1
        %s550 = scalar_select %p549, %s19, 1
        %s551 = smul.addr %s550, 4
        %s552 = smul.addr %s551, 8
        %s553 = scalar_lea.vmem %s3, %s552
        %p554 = scmp.lt.s32.totalorder %s19, 1
        %s555 = scalar_select %p554, %s19, 1
        %s556 = smul.addr %s555, 4
        %s557 = smul.addr %s556, 8
        %s558 = scalar_lea.vmem %s4, %s557
        // Predicated region
        $region37: #{dependency_encoder.1} parent=31 // pred_check
          %p559 = pneg %p110
        $region38: #{dependency_encoder.1} parent=31 // pred_check_branch
          %561 = sbr.rel (%p559) target = $region40
        $region39: #{dependency_encoder.1} parent=31 // pred_region
          _
        $region40: #{dependency_encoder.1} parent=31 // pred_fallthru
          _
        // Predicated region
        $region41: #{dependency_encoder.1} parent=31 // pred_check
          %p562 = pneg %p136
        $region42: #{dependency_encoder.1} parent=31 // pred_check_branch
          %564 = sbr.rel (%p562) target = $region44
        $region43: #{dependency_encoder.1} parent=31 // pred_region
          _
        $region44: #{dependency_encoder.1} parent=31 // pred_fallthru
          _
      $region32: #{dependency_encoder.1} parent=5 // pred_fallthru
        _
      %p565 = scmp.le.s32.totalorder 2, %s14
      // Predicated region
      $region45: #{dependency_encoder.1} parent=5 // pred_check
        %p566 = pneg %p565
      $region46: #{dependency_encoder.1} parent=5 // pred_check_branch
        %568 = sbr.rel (%p566) target = $region48
      $region47: #{dependency_encoder.1} parent=5 // pred_region
        %s569 = ssub.s32 %s14, 2
        // Predicated region
        $region49: #{dependency_encoder.1} parent=47 // pred_check
          %p570 = pneg %p116
        $region50: #{dependency_encoder.1} parent=47 // pred_check_branch
          %572 = sbr.rel (%p570) target = $region52
        $region51: #{dependency_encoder.1} parent=47 // pred_region
          %p573 = scmp.lt.s32.totalorder %s20, 1
          %s574 = scalar_select %p573, %s20, 1
          %s575 = smul.addr %s574, 4
          %s576 = smul.addr %s575, 8
          %s577 = scalar_lea.vmem %s3, %s576
        $region52: #{dependency_encoder.1} parent=47 // pred_fallthru
          _
        // Predicated region
        $region53: #{dependency_encoder.1} parent=47 // pred_check
          %p578 = pneg %p142
        $region54: #{dependency_encoder.1} parent=47 // pred_check_branch
          %580 = sbr.rel (%p578) target = $region56
        $region55: #{dependency_encoder.1} parent=47 // pred_region
          %p581 = scmp.lt.s32.totalorder %s20, 1
          %s582 = scalar_select %p581, %s20, 1
          %s583 = smul.addr %s582, 4
          %s584 = smul.addr %s583, 8
          %s585 = scalar_lea.vmem %s4, %s584
        $region56: #{dependency_encoder.1} parent=47 // pred_fallthru
          _
      $region48: #{dependency_encoder.1} parent=5 // pred_fallthru
        _
    $region6: #{dependency_encoder.1} parent=1 // loop_footer
      %s18 = sadd.s32 1, %s14
    $region7: #{dependency_encoder.1} parent=1 // loop_footer_branch
      %13 = sbr.rel target = $region3
    $region8: #{dependency_encoder.1} parent=1 // loop_exit
      _
    %586 = vsyncpa [#allocation3], 1
    %s587 = scalar_lea.sflag [#allocation3], 1
    %588 = vsyncpa %s587, 1

</llo_original>
